<compile_context>
chip_gen: v7x
topology: tpu7x:2x2x1
jax: 0.10.0
libtpu: 0.0.40
codegen_flags: <defaults>
</compile_context>

<pallas_src>
import functools
import math

import jax
import jax.numpy as jnp
import numpy as np
from jax.experimental import pallas as pl
from jax.experimental.pallas import tpu as pltpu


def _group_conv_kernel(x_ref, w_ref, o_ref, *, n_scales, K, TT, BB, Pmax):
    """One grid step == BB batch elements x one time tile.

    x_ref : (BB, 1, C, TT + 2*Pmax)  halo'd, zero-padded time slab (lane axis = time)
    w_ref : (n_scales, K, O, C)      per-scale / per-tap weights, 1/scale folded in
    o_ref : (BB, n_scales, O, TT)    TT is a multiple of 128 -> lane-dense stores
    """
    for bb in range(BB):                      # statically unrolled (BB <= 8)
        for j in range(n_scales):             # statically unrolled over scales
            scale = 2 ** j
            pad = scale * (K - 1) // 2
            acc = None
            for k in range(K):                # K accumulated dots, no im2col copy
                start = Pmax - pad + k * scale            # static offset
                xs = x_ref[bb, 0, :, pl.ds(start, TT)]    # (C, TT)
                d = jnp.dot(w_ref[j, k], xs, preferred_element_type=jnp.float32)
                acc = d if acc is None else acc + d
            o_ref[bb, j] = acc.astype(o_ref.dtype)


def _pick_batch_tile(B, max_bb=8):
    """Largest divisor of B (<= max_bb) that still leaves >= 2 grid steps."""
    if B <= 1:
        return 1
    best = 1
    for bb in range(1, min(max_bb, B) + 1):
        if B % bb == 0 and B // bb >= 2:
            best = bb
    return best


def _auto_t_tile(Tpad_full, C, BB, n_scales, O, Pmax, itemsize,
                 budget_bytes=12 << 20):
    """Largest multiple-of-128 time tile whose double-buffered blocks fit budget."""
    tt = Tpad_full
    while tt > 128:
        xb = BB * C * (tt + 2 * Pmax) * itemsize
        ob = BB * n_scales * O * tt * itemsize
        if 2 * (xb + ob) <= budget_bytes:
            break
        tt = max(128, (((tt // 2) + 127) // 128) * 128)
    return tt


def group_convolution_layer(x, kernel, S=None, t_tile=None, out_layout="torch"):
    """Pallas implementation of GroupConvolutionLayer.forward.

    x:      (B, C, T, S_in) float32
    kernel: (O, C, K)       float32   (K must be odd, as the reference requires)
    out_layout: "torch"  -> (B, O, T, n_scales)  (PyTorch-identical, default)
                "native" -> (B, n_scales, O, T)  (skips the final transpose pass)
    """
    B, C, T, S_in = x.shape
    O, Ck, K = kernel.shape
    assert Ck == C
    assert K % 2 == 1, "kernel_size must be odd for 'same'-length dilated conv"

    if S is not None:
        n_scales = S
    else:
        # mirrors PyTorch: max(1, int(math.log2(T / kernel_size)))
        n_scales = max(1, int(math.log2(T / K)))

    itemsize = jnp.dtype(x.dtype).itemsize
    Pmax = (2 ** (n_scales - 1)) * (K - 1) // 2
    LANE = 128
    Tpad_full = ((T + LANE - 1) // LANE) * LANE          # lane-dense output width

    # --- tiling choices ----------------------------------------------------
    BB = _pick_batch_tile(B)
    if t_tile is not None:
        TT = min(Tpad_full, max(LANE, ((int(t_tile) + LANE - 1) // LANE) * LANE))
    else:
        TT = _auto_t_tile(Tpad_full, C, BB, n_scales, O, Pmax, itemsize)
    nt = (Tpad_full + TT - 1) // TT
    Tpad = nt * TT
    Thalo = TT + 2 * Pmax

    # --- plain-JAX glue (exact algebraic prework, fuses into ~one HBM pass) -
    # Integration weights [1, 1, 2, 4, ...]; collapse S_in BEFORE the conv
    # (the conv is linear and identical for every s, so this commutes).
    iw = jnp.array([1.0] + [2.0 ** (z - 1) for z in range(1, S_in)], dtype=x.dtype)
    x_red = (x * iw.reshape(1, 1, 1, S_in)).sum(axis=-1)          # (B, C, T)
    x_p = jnp.pad(x_red, ((0, 0), (0, 0), (Pmax, Pmax + (Tpad - T))))
    # Halo'd per-tile slabs so the kernel BlockSpec stays plain Blocked.
    if nt == 1:
        x_blk = x_p[:, None, :, :]                                # (B, 1, C, Thalo)
    else:
        x_blk = jnp.stack(
            [x_p[:, :, t * TT: t * TT + Thalo] for t in range(nt)], axis=1)

    # Weights: (O, C, K) -> (n_scales, K, O, C) with exact 1/2**j folded in.
    w_kt = jnp.transpose(kernel, (2, 0, 1))                       # (K, O, C)
    inv_scales = jnp.array([1.0 / (2 ** j) for j in range(n_scales)],
                           dtype=kernel.dtype)
    w_all = w_kt[None] * inv_scales[:, None, None, None]          # (n_scales, K, O, C)

    # --- VMEM budget (double-buffer counted once, +30% headroom, per-chip cap)
    xblk_bytes = BB * 1 * C * Thalo * itemsize
    oblk_bytes = BB * n_scales * O * TT * itemsize
    w_bytes = n_scales * K * O * C * itemsize
    need = 2 * (xblk_bytes + oblk_bytes) + 2 * w_bytes
    try:
        info = pltpu.get_tpu_info()
        vmem_cap = int(getattr(info, "vmem_capacity_bytes", 128 << 20))
    except Exception:
        vmem_cap = 64 << 20
    cap = (vmem_cap * 3) // 4
    vmem_limit = int(min(cap, max(16 << 20, int(need * 1.3))))

    kern = functools.partial(_group_conv_kernel, n_scales=n_scales, K=K,
                             TT=TT, BB=BB, Pmax=Pmax)

    out = pl.pallas_call(
        kern,
        out_shape=jax.ShapeDtypeStruct((B, n_scales, O, Tpad), x.dtype),
        grid=(B // BB, nt),
        in_specs=[
            pl.BlockSpec((BB, 1, C, Thalo), lambda b, t: (b, t, 0, 0)),
            pl.BlockSpec((n_scales, K, O, C), lambda b, t: (0, 0, 0, 0)),
        ],
        out_specs=pl.BlockSpec((BB, n_scales, O, TT), lambda b, t: (b, 0, 0, t)),
        compiler_params=pltpu.CompilerParams(
            dimension_semantics=("parallel", "parallel"),
            vmem_limit_bytes=vmem_limit),
    )(x_blk, w_all)

    out = out[..., :T]                       # drop lane padding
    if out_layout == "native":
        return out                           # (B, n_scales, O, T)
    # PyTorch output layout (B, O, T, n_scales)
    return jnp.transpose(out, (0, 2, 3, 1))


def _reference(x, kernel, n_scales):
    """Pure-JAX reference mirroring the PyTorch forward (for validation)."""
    B, C, T, S_in = x.shape
    O, _, K = kernel.shape
    iw = jnp.array([1.0] + [2.0 ** (z - 1) for z in range(1, S_in)],
                   dtype=x.dtype).reshape(1, 1, 1, S_in)
    x_perm = jnp.transpose(x, (0, 3, 1, 2)).reshape(B * S_in, C, T)
    outs = []
    for j in range(n_scales):
        scale = 2 ** j
        pad = scale * (K - 1) // 2
        conv = jax.lax.conv_general_dilated(
            x_perm, kernel, window_strides=(1,), padding=[(pad, pad)],
            rhs_dilation=(scale,), dimension_numbers=("NCH", "OIH", "NCH"))
        conv = conv.reshape(B, S_in, O, T).transpose(0, 2, 3, 1)
        out = (conv * iw).sum(axis=3) / scale
        outs.append(out[..., None])
    return jnp.concatenate(outs, axis=-1)


if __name__ == "__main__":
    # Small configs exercising: the default path, BB>1 with T not a multiple
    # of 128 (masked only at the wrapper slice, kernel stays lane-dense), and
    # the T-tile + halo path (forced small t_tile).
    configs = [
        dict(B=2, C=4, T=128, S_in=8, O=8, K=3, S=3, t_tile=None),
        dict(B=4, C=4, T=96,  S_in=6, O=8, K=3, S=2, t_tile=None),
        dict(B=2, C=4, T=256, S_in=8, O=8, K=3, S=3, t_tile=128),
    ]
    key = jax.random.PRNGKey(0)
    for cfg in configs:
        key, kx, kw = jax.random.split(key, 3)
        x = jax.random.normal(kx, (cfg["B"], cfg["C"], cfg["T"], cfg["S_in"]),
                              dtype=jnp.float32)
        kernel = jax.random.normal(kw, (cfg["O"], cfg["C"], cfg["K"]),
                                   dtype=jnp.float32)

        y = group_convolution_layer(x, kernel, cfg["S"], t_tile=cfg["t_tile"])
        y = jax.block_until_ready(y)
        assert y.shape == (cfg["B"], cfg["O"], cfg["T"], cfg["S"]), y.shape

        y_ref = jax.block_until_ready(_reference(x, kernel, cfg["S"]))
        y_np, y_ref_np = np.asarray(y), np.asarray(y_ref)
        # The S_in pre-reduction reassociates the weighted sum relative to the
        # PyTorch order; allow an absolute floor scaled to the data magnitude.
        atol = 1e-5 * float(np.max(np.abs(y_ref_np)))
        np.testing.assert_allclose(y_np, y_ref_np, rtol=1e-5, atol=atol)

    print("KERNEL_OK")
</pallas_src>

<mosaic_0001>
module attributes {stable_mosaic.version = 11 : i64} {
  func.func @_group_conv_kernel(%arg0: i32, %arg1: i32, %arg2: memref<1x1x4x136xf32, #tpu.memory_space<vmem>>, %arg3: memref<3x3x8x4xf32, #tpu.memory_space<vmem>>, %arg4: memref<1x3x8x128xf32, #tpu.memory_space<vmem>>) attributes {dimension_semantics = [#tpu.dimension_semantics<parallel>, #tpu.dimension_semantics<parallel>], iteration_bounds = array<i64: 2, 1>, scalar_prefetch = 0 : i64, scratch_operands = 0 : i64, tpu.core_type = #tpu.core_type<tc>, window_params = [{transform_indices = @transform_0, window_bounds = array<i64: 1, 1, 4, 136>}, {pipeline_mode = #tpu.pipeline_mode<synchronous>, transform_indices = @transform_1, window_bounds = array<i64: 3, 3, 8, 4>}, {transform_indices = @transform_2, window_bounds = array<i64: 1, 3, 8, 128>}]} {
    %c0 = arith.constant 0 : index
    %c0_0 = arith.constant 0 : index
    %c0_1 = arith.constant 0 : index
    %c3 = arith.constant 3 : index
    %0 = vector.load %arg2[%c0, %c0_0, %c0_1, %c3] : memref<1x1x4x136xf32, #tpu.memory_space<vmem>>, vector<1x1x4x128xf32>
    %1 = vector.shape_cast %0 : vector<1x1x4x128xf32> to vector<4x128xf32>
    %c0_2 = arith.constant 0 : index
    %c0_3 = arith.constant 0 : index
    %c0_4 = arith.constant 0 : index
    %c0_5 = arith.constant 0 : index
    %2 = vector.load %arg3[%c0_2, %c0_3, %c0_4, %c0_5] : memref<3x3x8x4xf32, #tpu.memory_space<vmem>>, vector<1x1x8x4xf32>
    %3 = vector.shape_cast %2 : vector<1x1x8x4xf32> to vector<8x4xf32>
    %cst = arith.constant dense<0.000000e+00> : vector<8x128xf32>
    %4 = tpu.matmul %3, %1, %cst {dimension_numbers = #tpu.dot_dimension_numbers<[1], [0], [0], [1], [0, 0, 1, 1], [], []>} : vector<8x4xf32>, vector<4x128xf32>, vector<8x128xf32> -> vector<8x128xf32>
    %c0_6 = arith.constant 0 : index
    %c0_7 = arith.constant 0 : index
    %c0_8 = arith.constant 0 : index
    %c4 = arith.constant 4 : index
    %5 = vector.load %arg2[%c0_6, %c0_7, %c0_8, %c4] : memref<1x1x4x136xf32, #tpu.memory_space<vmem>>, vector<1x1x4x128xf32>
    %6 = vector.shape_cast %5 : vector<1x1x4x128xf32> to vector<4x128xf32>
    %c0_9 = arith.constant 0 : index
    %c1 = arith.constant 1 : index
    %c0_10 = arith.constant 0 : index
    %c0_11 = arith.constant 0 : index
    %7 = vector.load %arg3[%c0_9, %c1, %c0_10, %c0_11] : memref<3x3x8x4xf32, #tpu.memory_space<vmem>>, vector<1x1x8x4xf32>
    %8 = vector.shape_cast %7 : vector<1x1x8x4xf32> to vector<8x4xf32>
    %cst_12 = arith.constant dense<0.000000e+00> : vector<8x128xf32>
    %9 = tpu.matmul %8, %6, %cst_12 {dimension_numbers = #tpu.dot_dimension_numbers<[1], [0], [0], [1], [0, 0, 1, 1], [], []>} : vector<8x4xf32>, vector<4x128xf32>, vector<8x128xf32> -> vector<8x128xf32>
    %10 = arith.addf %4, %9 : vector<8x128xf32>
    %c0_13 = arith.constant 0 : index
    %c0_14 = arith.constant 0 : index
    %c0_15 = arith.constant 0 : index
    %c5 = arith.constant 5 : index
    %11 = vector.load %arg2[%c0_13, %c0_14, %c0_15, %c5] : memref<1x1x4x136xf32, #tpu.memory_space<vmem>>, vector<1x1x4x128xf32>
    %12 = vector.shape_cast %11 : vector<1x1x4x128xf32> to vector<4x128xf32>
    %c0_16 = arith.constant 0 : index
    %c2 = arith.constant 2 : index
    %c0_17 = arith.constant 0 : index
    %c0_18 = arith.constant 0 : index
    %13 = vector.load %arg3[%c0_16, %c2, %c0_17, %c0_18] : memref<3x3x8x4xf32, #tpu.memory_space<vmem>>, vector<1x1x8x4xf32>
    %14 = vector.shape_cast %13 : vector<1x1x8x4xf32> to vector<8x4xf32>
    %cst_19 = arith.constant dense<0.000000e+00> : vector<8x128xf32>
    %15 = tpu.matmul %14, %12, %cst_19 {dimension_numbers = #tpu.dot_dimension_numbers<[1], [0], [0], [1], [0, 0, 1, 1], [], []>} : vector<8x4xf32>, vector<4x128xf32>, vector<8x128xf32> -> vector<8x128xf32>
    %16 = arith.addf %10, %15 : vector<8x128xf32>
    %c0_20 = arith.constant 0 : index
    %c0_21 = arith.constant 0 : index
    %c0_22 = arith.constant 0 : index
    %c0_23 = arith.constant 0 : index
    %17 = vector.load %arg4[%c0_20, %c0_21, %c0_22, %c0_23] : memref<1x3x8x128xf32, #tpu.memory_space<vmem>>, vector<1x1x8x128xf32>
    %18 = vector.shape_cast %17 : vector<1x1x8x128xf32> to vector<8x128xf32>
    %19 = vector.shape_cast %16 : vector<8x128xf32> to vector<1x1x8x128xf32>
    tpu.vector_store %arg4[%c0_20, %c0_21, %c0_22, %c0_23], %19 {strides = array<i32>} : memref<1x3x8x128xf32, #tpu.memory_space<vmem>>, vector<1x1x8x128xf32>,
    %c0_24 = arith.constant 0 : index
    %c0_25 = arith.constant 0 : index
    %c0_26 = arith.constant 0 : index
    %c2_27 = arith.constant 2 : index
    %20 = vector.load %arg2[%c0_24, %c0_25, %c0_26, %c2_27] : memref<1x1x4x136xf32, #tpu.memory_space<vmem>>, vector<1x1x4x128xf32>
    %21 = vector.shape_cast %20 : vector<1x1x4x128xf32> to vector<4x128xf32>
    %c1_28 = arith.constant 1 : index
    %c0_29 = arith.constant 0 : index
    %c0_30 = arith.constant 0 : index
    %c0_31 = arith.constant 0 : index
    %22 = vector.load %arg3[%c1_28, %c0_29, %c0_30, %c0_31] : memref<3x3x8x4xf32, #tpu.memory_space<vmem>>, vector<1x1x8x4xf32>
    %23 = vector.shape_cast %22 : vector<1x1x8x4xf32> to vector<8x4xf32>
    %cst_32 = arith.constant dense<0.000000e+00> : vector<8x128xf32>
    %24 = tpu.matmul %23, %21, %cst_32 {dimension_numbers = #tpu.dot_dimension_numbers<[1], [0], [0], [1], [0, 0, 1, 1], [], []>} : vector<8x4xf32>, vector<4x128xf32>, vector<8x128xf32> -> vector<8x128xf32>
    %c0_33 = arith.constant 0 : index
    %c0_34 = arith.constant 0 : index
    %c0_35 = arith.constant 0 : index
    %c4_36 = arith.constant 4 : index
    %25 = vector.load %arg2[%c0_33, %c0_34, %c0_35, %c4_36] : memref<1x1x4x136xf32, #tpu.memory_space<vmem>>, vector<1x1x4x128xf32>
    %26 = vector.shape_cast %25 : vector<1x1x4x128xf32> to vector<4x128xf32>
    %c1_37 = arith.constant 1 : index
    %c1_38 = arith.constant 1 : index
    %c0_39 = arith.constant 0 : index
    %c0_40 = arith.constant 0 : index
    %27 = vector.load %arg3[%c1_37, %c1_38, %c0_39, %c0_40] : memref<3x3x8x4xf32, #tpu.memory_space<vmem>>, vector<1x1x8x4xf32>
    %28 = vector.shape_cast %27 : vector<1x1x8x4xf32> to vector<8x4xf32>
    %cst_41 = arith.constant dense<0.000000e+00> : vector<8x128xf32>
    %29 = tpu.matmul %28, %26, %cst_41 {dimension_numbers = #tpu.dot_dimension_numbers<[1], [0], [0], [1], [0, 0, 1, 1], [], []>} : vector<8x4xf32>, vector<4x128xf32>, vector<8x128xf32> -> vector<8x128xf32>
    %30 = arith.addf %24, %29 : vector<8x128xf32>
    %c0_42 = arith.constant 0 : index
    %c0_43 = arith.constant 0 : index
    %c0_44 = arith.constant 0 : index
    %c6 = arith.constant 6 : index
    %31 = vector.load %arg2[%c0_42, %c0_43, %c0_44, %c6] : memref<1x1x4x136xf32, #tpu.memory_space<vmem>>, vector<1x1x4x128xf32>
    %32 = vector.shape_cast %31 : vector<1x1x4x128xf32> to vector<4x128xf32>
    %c1_45 = arith.constant 1 : index
    %c2_46 = arith.constant 2 : index
    %c0_47 = arith.constant 0 : index
    %c0_48 = arith.constant 0 : index
    %33 = vector.load %arg3[%c1_45, %c2_46, %c0_47, %c0_48] : memref<3x3x8x4xf32, #tpu.memory_space<vmem>>, vector<1x1x8x4xf32>
    %34 = vector.shape_cast %33 : vector<1x1x8x4xf32> to vector<8x4xf32>
    %cst_49 = arith.constant dense<0.000000e+00> : vector<8x128xf32>
    %35 = tpu.matmul %34, %32, %cst_49 {dimension_numbers = #tpu.dot_dimension_numbers<[1], [0], [0], [1], [0, 0, 1, 1], [], []>} : vector<8x4xf32>, vector<4x128xf32>, vector<8x128xf32> -> vector<8x128xf32>
    %36 = arith.addf %30, %35 : vector<8x128xf32>
    %c0_50 = arith.constant 0 : index
    %c1_51 = arith.constant 1 : index
    %c0_52 = arith.constant 0 : index
    %c0_53 = arith.constant 0 : index
    %37 = vector.load %arg4[%c0_50, %c1_51, %c0_52, %c0_53] : memref<1x3x8x128xf32, #tpu.memory_space<vmem>>, vector<1x1x8x128xf32>
    %38 = vector.shape_cast %37 : vector<1x1x8x128xf32> to vector<8x128xf32>
    %39 = vector.shape_cast %36 : vector<8x128xf32> to vector<1x1x8x128xf32>
    tpu.vector_store %arg4[%c0_50, %c1_51, %c0_52, %c0_53], %39 {strides = array<i32>} : memref<1x3x8x128xf32, #tpu.memory_space<vmem>>, vector<1x1x8x128xf32>,
    %c0_54 = arith.constant 0 : index
    %c0_55 = arith.constant 0 : index
    %c0_56 = arith.constant 0 : index
    %c0_57 = arith.constant 0 : index
    %40 = vector.load %arg2[%c0_54, %c0_55, %c0_56, %c0_57] : memref<1x1x4x136xf32, #tpu.memory_space<vmem>>, vector<1x1x4x128xf32>
    %41 = vector.shape_cast %40 : vector<1x1x4x128xf32> to vector<4x128xf32>
    %c2_58 = arith.constant 2 : index
    %c0_59 = arith.constant 0 : index
    %c0_60 = arith.constant 0 : index
    %c0_61 = arith.constant 0 : index
    %42 = vector.load %arg3[%c2_58, %c0_59, %c0_60, %c0_61] : memref<3x3x8x4xf32, #tpu.memory_space<vmem>>, vector<1x1x8x4xf32>
    %43 = vector.shape_cast %42 : vector<1x1x8x4xf32> to vector<8x4xf32>
    %cst_62 = arith.constant dense<0.000000e+00> : vector<8x128xf32>
    %44 = tpu.matmul %43, %41, %cst_62 {dimension_numbers = #tpu.dot_dimension_numbers<[1], [0], [0], [1], [0, 0, 1, 1], [], []>} : vector<8x4xf32>, vector<4x128xf32>, vector<8x128xf32> -> vector<8x128xf32>
    %c0_63 = arith.constant 0 : index
    %c0_64 = arith.constant 0 : index
    %c0_65 = arith.constant 0 : index
    %c4_66 = arith.constant 4 : index
    %45 = vector.load %arg2[%c0_63, %c0_64, %c0_65, %c4_66] : memref<1x1x4x136xf32, #tpu.memory_space<vmem>>, vector<1x1x4x128xf32>
    %46 = vector.shape_cast %45 : vector<1x1x4x128xf32> to vector<4x128xf32>
    %c2_67 = arith.constant 2 : index
    %c1_68 = arith.constant 1 : index
    %c0_69 = arith.constant 0 : index
    %c0_70 = arith.constant 0 : index
    %47 = vector.load %arg3[%c2_67, %c1_68, %c0_69, %c0_70] : memref<3x3x8x4xf32, #tpu.memory_space<vmem>>, vector<1x1x8x4xf32>
    %48 = vector.shape_cast %47 : vector<1x1x8x4xf32> to vector<8x4xf32>
    %cst_71 = arith.constant dense<0.000000e+00> : vector<8x128xf32>
    %49 = tpu.matmul %48, %46, %cst_71 {dimension_numbers = #tpu.dot_dimension_numbers<[1], [0], [0], [1], [0, 0, 1, 1], [], []>} : vector<8x4xf32>, vector<4x128xf32>, vector<8x128xf32> -> vector<8x128xf32>
    %50 = arith.addf %44, %49 : vector<8x128xf32>
    %c0_72 = arith.constant 0 : index
    %c0_73 = arith.constant 0 : index
    %c0_74 = arith.constant 0 : index
    %c8 = arith.constant 8 : index
    %51 = vector.load %arg2[%c0_72, %c0_73, %c0_74, %c8] : memref<1x1x4x136xf32, #tpu.memory_space<vmem>>, vector<1x1x4x128xf32>
    %52 = vector.shape_cast %51 : vector<1x1x4x128xf32> to vector<4x128xf32>
    %c2_75 = arith.constant 2 : index
    %c2_76 = arith.constant 2 : index
    %c0_77 = arith.constant 0 : index
    %c0_78 = arith.constant 0 : index
    %53 = vector.load %arg3[%c2_75, %c2_76, %c0_77, %c0_78] : memref<3x3x8x4xf32, #tpu.memory_space<vmem>>, vector<1x1x8x4xf32>
    %54 = vector.shape_cast %53 : vector<1x1x8x4xf32> to vector<8x4xf32>
    %cst_79 = arith.constant dense<0.000000e+00> : vector<8x128xf32>
    %55 = tpu.matmul %54, %52, %cst_79 {dimension_numbers = #tpu.dot_dimension_numbers<[1], [0], [0], [1], [0, 0, 1, 1], [], []>} : vector<8x4xf32>, vector<4x128xf32>, vector<8x128xf32> -> vector<8x128xf32>
    %56 = arith.addf %50, %55 : vector<8x128xf32>
    %c0_80 = arith.constant 0 : index
    %c2_81 = arith.constant 2 : index
    %c0_82 = arith.constant 0 : index
    %c0_83 = arith.constant 0 : index
    %57 = vector.load %arg4[%c0_80, %c2_81, %c0_82, %c0_83] : memref<1x3x8x128xf32, #tpu.memory_space<vmem>>, vector<1x1x8x128xf32>
    %58 = vector.shape_cast %57 : vector<1x1x8x128xf32> to vector<8x128xf32>
    %59 = vector.shape_cast %56 : vector<8x128xf32> to vector<1x1x8x128xf32>
    tpu.vector_store %arg4[%c0_80, %c2_81, %c0_82, %c0_83], %59 {strides = array<i32>} : memref<1x3x8x128xf32, #tpu.memory_space<vmem>>, vector<1x1x8x128xf32>,
    return
  }
  func.func @transform_0(%arg0: i32, %arg1: i32) -> (i32, i32, i32, i32) {
    %c0_i32 = arith.constant 0 : i32
    %c0_i32_0 = arith.constant 0 : i32
    %c0_i32_1 = arith.constant 0 : i32
    return %arg0, %arg1, %c0_i32, %c0_i32_0 : i32, i32, i32, i32
  }
  func.func @transform_1(%arg0: i32, %arg1: i32) -> (i32, i32, i32, i32) {
    %c0_i32 = arith.constant 0 : i32
    %c0_i32_0 = arith.constant 0 : i32
    %c0_i32_1 = arith.constant 0 : i32
    %c0_i32_2 = arith.constant 0 : i32
    %c0_i32_3 = arith.constant 0 : i32
    return %c0_i32, %c0_i32_0, %c0_i32_1, %c0_i32_2 : i32, i32, i32, i32
  }
  func.func @transform_2(%arg0: i32, %arg1: i32) -> (i32, i32, i32, i32) {
    %c0_i32 = arith.constant 0 : i32
    %c0_i32_0 = arith.constant 0 : i32
    %c0_i32_1 = arith.constant 0 : i32
    return %arg0, %c0_i32, %c0_i32_0, %arg1 : i32, i32, i32, i32
  }
}

</mosaic_0001>

<llo_original>
// kernel: tpu_custom_call.1
$region0: #{tpu_custom_call.1}
  #allocation0 [shape = 'u32[]', space=smem, size = 0x4, offset = 0x4, fixed_abs, tag = 'smem constant byte address 0x4 - core index']
  #allocation1 [shape = 'u32[144,128]{1,0:T(1,128)}', space=vmem, size = 0x12000, scoped, tag = 'internal scratch']
  %s0 = inlined_call_operand.vmem [shape: f32[2,1,4,136], index: 0, kind: input, shape index: {}]
  %s1 = inlined_call_operand.vmem [shape: f32[3,3,8,4], index: 1, kind: input, shape index: {}]
  %s2 = inlined_call_operand.hbm [shape: f32[2,3,8,128], index: 2, kind: output, shape index: {}]
  %s3 = sld [smem:[#allocation0]]
  $region41: #{tpu_custom_call.1} parent=0
    _
  %s5 = ssub.s32 1, %s3
  %s6 = scalar_select 0, %s5, %s3
  $region1: #{tpu_custom_call.1} parent=0
    #allocation2 [shape = 'u8[24576]{0}', space=vmem, size = 0x6000, scoped, tag = 'output window, operand 0']
    #allocation3 [shape = 's32[2]{0}', space=sflag, size = 0x8, scoped, tag = 'scoped memory for tpu_custom_call.1']
    %7 = vsyncpa [#allocation3], 0
    %s8 = scalar_lea.sflag [#allocation3], 1
    %9 = vsyncpa %s8, 0
    loop: start=0, step=1, limit=4
    $region2: #{tpu_custom_call.1} parent=1 // loop_pre_header
      _
    $region3: #{tpu_custom_call.1} parent=1 // loop_header
      %s11 = sphi 0, %s15
      %p12 = scmp.ge.s32.totalorder %s11, 4
      %s18 = sphi 0, %s30
      %s19 = sphi 0, %s26
      %s20 = sphi 0, %s18
      %s21 = sphi 0, %s19
      %s22 = sphi 0, %s20
      %s23 = sphi 0, %s21
      %s35 = sphi 0, %s37
      %s38 = sphi 0, %s35
      %s39 = sphi 0, %s38
      %s55 = sphi 0, %s39
      %s59 = sphi 0, %s59
      %s61 = sphi 0, %s59
      %s62 = sphi 0, %s61
      %s76 = sphi 0, %s62
      %s84 = sphi 0, %s86
      %s87 = sphi 0, %s84
      %s88 = sphi 0, %s87
      %s104 = sphi 0, %s88
    $region4: #{tpu_custom_call.1} parent=1 // loop_header_branch
      %14 = sbr.rel (%p12) target = $region8
    $region5: #{tpu_custom_call.1} parent=1 // loop_body
      %s16 = ssub.s32 %s11, 1
      %s17 = ssub.s32 %s11, 2
      %s24 = sadd.s32 1, %s19
      %p25 = scmp.ge.s32.totalorder %s24, 1
      %s26 = scalar_select %p25, 0, %s24
      %s27 = sadd.s32 1, %s18
      %s28 = scalar_select %p25, %s27, %s18
      %p29 = scmp.ge.s32.totalorder %s28, 2
      %s30 = scalar_select %p29, 0, %s28
      %s31 = ssub.s32 %s18, %s30
      %s32 = ssub.s32 %s19, %s26
      %s33 = sor.u32 %s31, %s32
      %p34 = scmp.eq.s32.totalorder %s33, 0
      %s36 = sadd.s32 %s35, 1
      %s37 = scalar_select %p34, %s35, %s36
      %p40 = pneg %p34
      %p41 = scmp.eq.s32.totalorder %s11, 1
      %p42 = por %p40, %p41
      %p43 = scmp.ne.s32.totalorder %s35, %s38
      %p44 = scmp.eq.s32.totalorder %s11, 0
      %p45 = por %p43, %p44
      %p46 = scmp.ne.s32.totalorder %s35, %s38
      %p47 = scmp.eq.s32.totalorder %s16, 1
      %p48 = por %p46, %p47
      %p49 = scmp.ne.s32.totalorder %s38, %s39
      %p50 = scmp.eq.s32.totalorder %s16, 0
      %p51 = por %p49, %p50
      %p52 = scmp.ne.s32.totalorder %s38, %s39
      %p53 = scmp.eq.s32.totalorder %s17, 1
      %p54 = por %p52, %p53
      %p56 = scmp.ne.s32.totalorder %s39, %s55
      %p57 = scmp.eq.s32.totalorder %s17, 0
      %p58 = por %p56, %p57
      %s60 = sadd.s32 %s59, 1
      %p63 = scmp.eq.s32.totalorder %s11, 1
      %p64 = scmp.ne.s32.totalorder %s59, %s61
      %p65 = scmp.eq.s32.totalorder %s11, 0
      %p66 = por %p64, %p65
      %p67 = scmp.ne.s32.totalorder %s59, %s61
      %p68 = scmp.eq.s32.totalorder %s16, 1
      %p69 = por %p67, %p68
      %p70 = scmp.ne.s32.totalorder %s61, %s62
      %p71 = scmp.eq.s32.totalorder %s16, 0
      %p72 = por %p70, %p71
      %p73 = scmp.ne.s32.totalorder %s61, %s62
      %p74 = scmp.eq.s32.totalorder %s17, 1
      %p75 = por %p73, %p74
      %p77 = scmp.ne.s32.totalorder %s62, %s76
      %p78 = scmp.eq.s32.totalorder %s17, 0
      %p79 = por %p77, %p78
      %s80 = ssub.s32 %s18, %s30
      %s81 = ssub.s32 %s19, %s26
      %s82 = sor.u32 %s80, %s81
      %p83 = scmp.eq.s32.totalorder %s82, 0
      %s85 = sadd.s32 %s84, 1
      %s86 = scalar_select %p83, %s84, %s85
      %p89 = pneg %p83
      %p90 = scmp.eq.s32.totalorder %s11, 1
      %p91 = por %p89, %p90
      %p92 = scmp.ne.s32.totalorder %s84, %s87
      %p93 = scmp.eq.s32.totalorder %s11, 0
      %p94 = por %p92, %p93
      %p95 = scmp.ne.s32.totalorder %s84, %s87
      %p96 = scmp.eq.s32.totalorder %s16, 1
      %p97 = por %p95, %p96
      %p98 = scmp.ne.s32.totalorder %s87, %s88
      %p99 = scmp.eq.s32.totalorder %s16, 0
      %p100 = por %p98, %p99
      %p101 = scmp.ne.s32.totalorder %s87, %s88
      %p102 = scmp.eq.s32.totalorder %s17, 1
      %p103 = por %p101, %p102
      %p105 = scmp.ne.s32.totalorder %s88, %s104
      %p106 = scmp.eq.s32.totalorder %s17, 0
      %p107 = por %p105, %p106
      %p108 = scmp.le.s32.totalorder 1, %s11
      %p109 = scmp.lt.s32.totalorder %s11, 3
      %p110 = pnand %p108, %p109
      %p111 = pneg %p110
      // Predicated region
      $region9: #{tpu_custom_call.1} parent=5 // pred_check
        _
      $region10: #{tpu_custom_call.1} parent=5 // pred_check_branch
        %113 = sbr.rel (%p110) target = $region12
      $region11: #{tpu_custom_call.1} parent=5 // pred_region
        %s114 = ssub.s32 %s11, 1
        // Predicated region
        $region13: #{tpu_custom_call.1} parent=11 // pred_check
          %p115 = pneg %p72
        $region14: #{tpu_custom_call.1} parent=11 // pred_check_branch
          %117 = sbr.rel (%p115) target = $region16
        $region15: #{tpu_custom_call.1} parent=11 // pred_region
          _
        $region16: #{tpu_custom_call.1} parent=11 // pred_fallthru
          _
      $region12: #{tpu_custom_call.1} parent=5 // pred_fallthru
        _
      %p118 = scmp.lt.s32.totalorder %s11, 2
      // Predicated region
      $region17: #{tpu_custom_call.1} parent=5 // pred_check
        %p119 = pneg %p118
      $region18: #{tpu_custom_call.1} parent=5 // pred_check_branch
        %121 = sbr.rel (%p119) target = $region20
      $region19: #{tpu_custom_call.1} parent=5 // pred_region
        // Predicated region
        $region21: #{tpu_custom_call.1} parent=19 // pred_check
          %p122 = pneg %p45
        $region22: #{tpu_custom_call.1} parent=19 // pred_check_branch
          %124 = sbr.rel (%p122) target = $region24
        $region23: #{tpu_custom_call.1} parent=19 // pred_region
          %p125 = scmp.lt.s32.totalorder %s18, 1
          %s126 = scalar_select %p125, %s18, 1
          %p127 = scmp.lt.s32.totalorder %s19, 0
          %s128 = scalar_select %p127, %s19, 0
          %s129 = smul.addr %s128, 2
          %s130 = smul.addr %s126, 2
          %s131 = sadd.s32 %s129, %s130
          %s132 = smul.addr %s131, 4
          %s133 = scalar_lea.vmem %s0, %s132
        $region24: #{tpu_custom_call.1} parent=19 // pred_fallthru
          _
      $region20: #{tpu_custom_call.1} parent=5 // pred_fallthru
        _
      %p134 = scmp.le.s32.totalorder 1, %s11
      %p135 = scmp.lt.s32.totalorder %s11, 3
      %p136 = pnand %p134, %p135
      %p137 = pneg %p136
      // Predicated region
      $region25: #{tpu_custom_call.1} parent=5 // pred_check
        _
      $region26: #{tpu_custom_call.1} parent=5 // pred_check_branch
        %139 = sbr.rel (%p136) target = $region28
      $region27: #{tpu_custom_call.1} parent=5 // pred_region
        %s140 = ssub.s32 %s11, 1
        %p141 = scmp.lt.s32.totalorder %s20, 1
        %s142 = scalar_select %p141, %s20, 1
        %p143 = scmp.lt.s32.totalorder %s21, 0
        %s144 = scalar_select %p143, %s21, 0
        %s145 = smul.addr %s144, 2
        %s146 = smul.addr %s142, 2
        %s147 = sadd.s32 %s145, %s146
        %s148 = smul.addr %s147, 4
        %s149 = scalar_lea.vmem %s0, %s148
        %p150 = pneg %p51
        %p151 = pneg %p48
        %p152 = pneg %p72
        %p153 = pneg %p69
        %p154 = pneg %p100
        %p155 = pneg %p97
        %s156 = sand.u32 %s87, 1
        %s157 = scalar_lea.sflag [#allocation3], %s156
        %s158 = sand.u32 %s87, 1
        %s159 = smul.addr %s158, 24
        %s160 = scalar_lea.vmem [#allocation2], %s159
        %p161 = scmp.lt.s32.totalorder %s20, 1
        %s162 = scalar_select %p161, %s20, 1
        %p163 = scmp.lt.s32.totalorder %s21, 0
        %s164 = scalar_select %p163, %s21, 0
        %s165 = smul.addr %s164, 2
        %s166 = smul.addr %s162, 2
        %s167 = sadd.s32 %s165, %s166
        %s168 = smul.addr %s167, 4
        %s169 = scalar_lea.vmem %s0, %s168
        %v170 = vld [vmem:[%s169] sm:$0xff]
        %v171 = vld [vmem:[%s1] sm:$0xff]
        %s172 = scalar_lea.vmem %s1, 8
        %v173 = vld [vmem:[%s172] sm:$0xff]
        %v175 = vcombine.high %v170, %v170
        %176 = vrot.lane.b32.xlu0 %v170, 124
        %v177 = vpop.permute.xlu0 %176
        %178 = vrot.lane.b32.xlu0 %v175, 124
        %v179 = vpop.permute.xlu0 %178
        %vm180 = vcmask 1014784
        %v181 = vsel %vm180, %v177, %v179
        %vm182 = vcmask 31744
        %v184 = vsel %vm182, %v173, 0
        %vm186 = vcmask 1043456
        %v187 = vsel %vm186, %v181, 0
        %189 = vmatprep.subr.mxu0 0.0
        %190 = vmatpush1.msra.mxu0 %v187
        %191 = vmatprep.subr.mxu0 0.0
        %192 = vmatpush1.msra.mxu0 0.0
        %193 = vmatprep.subr.mxu0 0.0
        %194 = vmatpush1.msra.mxu0 0.0
        %195 = vmatprep.subr.mxu0 0.0
        %196 = vmatpush1.msra.mxu0 0.0
        %197 = vmatprep.subr.mxu0 0.0
        %198 = vmatpush1.msra.mxu0 0.0
        %199 = vmatprep.subr.mxu0 0.0
        %200 = vmatpush1.msra.mxu0 0.0
        %201 = vmatprep.subr.mxu0 0.0
        %202 = vmatpush1.msra.mxu0 0.0
        %203 = vmatprep.subr.mxu0 0.0
        %204 = vmatpush1.msra.mxu0 0.0
        %205 = vmatprep.subr.mxu0 0.0
        %206 = vmatpush1.msra.mxu0 0.0
        %207 = vmatprep.subr.mxu0 0.0
        %208 = vmatpush1.msra.mxu0 0.0
        %209 = vmatprep.subr.mxu0 0.0
        %210 = vmatpush1.msra.mxu0 0.0
        %211 = vmatprep.subr.mxu0 0.0
        %212 = vmatpush1.msra.mxu0 0.0
        %213 = vmatprep.subr.mxu0 0.0
        %214 = vmatpush1.msra.mxu0 0.0
        %215 = vmatprep.subr.mxu0 0.0
        %216 = vmatpush1.msra.mxu0 0.0
        %217 = vmatprep.subr.mxu0 0.0
        %218 = vmatpush1.msra.mxu0 0.0
        %219 = vmatprep.subr.mxu0 0.0
        %220 = vmatpush1.msra.mxu0 0.0
        %221 = vmatprep.subr.mxu0 0.0
        %222 = vmatpush1.msra.mxu0 0.0
        %223 = vmatprep.subr.mxu0 0.0
        %224 = vmatpush1.msra.mxu0 0.0
        %225 = vmatprep.subr.mxu0 0.0
        %226 = vmatpush1.msra.mxu0 0.0
        %227 = vmatprep.subr.mxu0 0.0
        %228 = vmatpush1.msra.mxu0 0.0
        %229 = vmatprep.subr.mxu0 0.0
        %230 = vmatpush1.msra.mxu0 0.0
        %231 = vmatprep.subr.mxu0 0.0
        %232 = vmatpush1.msra.mxu0 0.0
        %233 = vmatprep.subr.mxu0 0.0
        %234 = vmatpush1.msra.mxu0 0.0
        %235 = vmatprep.subr.mxu0 0.0
        %236 = vmatpush1.msra.mxu0 0.0
        %237 = vmatprep.subr.mxu0 0.0
        %238 = vmatpush1.msra.mxu0 0.0
        %239 = vmatprep.subr.mxu0 0.0
        %240 = vmatpush1.msra.mxu0 0.0
        %241 = vmatprep.subr.mxu0 0.0
        %242 = vmatpush1.msra.mxu0 0.0
        %243 = vmatprep.subr.mxu0 0.0
        %244 = vmatpush1.msra.mxu0 0.0
        %245 = vmatprep.subr.mxu0 0.0
        %246 = vmatpush1.msra.mxu0 0.0
        %247 = vmatprep.subr.mxu0 0.0
        %248 = vmatpush1.msra.mxu0 0.0
        %249 = vmatprep.subr.mxu0 0.0
        %250 = vmatpush1.msra.mxu0 0.0
        %251 = vmatprep.subr.mxu0 0.0
        %252 = vmatpush1.msra.mxu0 0.0
        %253 = vmatprep.mubr.f32.mxu0 0.0
        %254 = vmatmul.mubr.f32.gmra.mrb[0].mxu0 %v184
        %v255 = vpop.f32.mrb[0].mxu0
        %v256 = vadd.f32 0.0, %v255
        %v257 = vpop.f32.mrb[0].mxu0
        %258 = vdwg.mxu0
        %259 = vrot.lane.b32.xlu0 %v170, 125
        %v260 = vpop.permute.xlu0 %259
        %261 = vrot.lane.b32.xlu0 %v175, 125
        %v262 = vpop.permute.xlu0 %261
        %vm263 = vcmask 1022976
        %v264 = vsel %vm263, %v260, %v262
        %v266 = vsel %vm182, %v171, 0
        %v268 = vsel %vm186, %v264, 0
        %270 = vmatprep.subr.mxu0 0.0
        %271 = vmatpush1.msra.mxu0 %v268
        %272 = vmatprep.subr.mxu0 0.0
        %273 = vmatpush1.msra.mxu0 0.0
        %274 = vmatprep.subr.mxu0 0.0
        %275 = vmatpush1.msra.mxu0 0.0
        %276 = vmatprep.subr.mxu0 0.0
        %277 = vmatpush1.msra.mxu0 0.0
        %278 = vmatprep.subr.mxu0 0.0
        %279 = vmatpush1.msra.mxu0 0.0
        %280 = vmatprep.subr.mxu0 0.0
        %281 = vmatpush1.msra.mxu0 0.0
        %282 = vmatprep.subr.mxu0 0.0
        %283 = vmatpush1.msra.mxu0 0.0
        %284 = vmatprep.subr.mxu0 0.0
        %285 = vmatpush1.msra.mxu0 0.0
        %286 = vmatprep.subr.mxu0 0.0
        %287 = vmatpush1.msra.mxu0 0.0
        %288 = vmatprep.subr.mxu0 0.0
        %289 = vmatpush1.msra.mxu0 0.0
        %290 = vmatprep.subr.mxu0 0.0
        %291 = vmatpush1.msra.mxu0 0.0
        %292 = vmatprep.subr.mxu0 0.0
        %293 = vmatpush1.msra.mxu0 0.0
        %294 = vmatprep.subr.mxu0 0.0
        %295 = vmatpush1.msra.mxu0 0.0
        %296 = vmatprep.subr.mxu0 0.0
        %297 = vmatpush1.msra.mxu0 0.0
        %298 = vmatprep.subr.mxu0 0.0
        %299 = vmatpush1.msra.mxu0 0.0
        %300 = vmatprep.subr.mxu0 0.0
        %301 = vmatpush1.msra.mxu0 0.0
        %302 = vmatprep.subr.mxu0 0.0
        %303 = vmatpush1.msra.mxu0 0.0
        %304 = vmatprep.subr.mxu0 0.0
        %305 = vmatpush1.msra.mxu0 0.0
        %306 = vmatprep.subr.mxu0 0.0
        %307 = vmatpush1.msra.mxu0 0.0
        %308 = vmatprep.subr.mxu0 0.0
        %309 = vmatpush1.msra.mxu0 0.0
        %310 = vmatprep.subr.mxu0 0.0
        %311 = vmatpush1.msra.mxu0 0.0
        %312 = vmatprep.subr.mxu0 0.0
        %313 = vmatpush1.msra.mxu0 0.0
        %314 = vmatprep.subr.mxu0 0.0
        %315 = vmatpush1.msra.mxu0 0.0
        %316 = vmatprep.subr.mxu0 0.0
        %317 = vmatpush1.msra.mxu0 0.0
        %318 = vmatprep.subr.mxu0 0.0
        %319 = vmatpush1.msra.mxu0 0.0
        %320 = vmatprep.subr.mxu0 0.0
        %321 = vmatpush1.msra.mxu0 0.0
        %322 = vmatprep.subr.mxu0 0.0
        %323 = vmatpush1.msra.mxu0 0.0
        %324 = vmatprep.subr.mxu0 0.0
        %325 = vmatpush1.msra.mxu0 0.0
        %326 = vmatprep.subr.mxu0 0.0
        %327 = vmatpush1.msra.mxu0 0.0
        %328 = vmatprep.subr.mxu0 0.0
        %329 = vmatpush1.msra.mxu0 0.0
        %330 = vmatprep.subr.mxu0 0.0
        %331 = vmatpush1.msra.mxu0 0.0
        %332 = vmatprep.subr.mxu0 0.0
        %333 = vmatpush1.msra.mxu0 0.0
        %334 = vmatprep.mubr.f32.mxu0 0.0
        %335 = vmatmul.mubr.f32.gmra.mrb[0].mxu0 %v266
        %v336 = vpop.f32.mrb[0].mxu0
        %v337 = vadd.f32 %v256, %v336
        %v338 = vpop.f32.mrb[0].mxu0
        %339 = vdwg.mxu0
        %v340 = vld [vmem:[%s169] sm:$0xff]
        %s341 = scalar_lea.vmem %s1, 16
        %v342 = vld [vmem:[%s341] sm:$0xff]
        %v344 = vcombine.high %v340, %v340
        %345 = vrot.lane.b32.xlu0 %v340, 123
        %v346 = vpop.permute.xlu0 %345
        %347 = vrot.lane.b32.xlu0 %v344, 123
        %v348 = vpop.permute.xlu0 %347
        %vm349 = vcmask 1006592
        %v350 = vsel %vm349, %v346, %v348
        %v352 = vsel %vm182, %v342, 0
        %v354 = vsel %vm186, %v350, 0
        %356 = vmatprep.subr.mxu0 0.0
        %357 = vmatpush1.msra.mxu0 %v354
        %358 = vmatprep.subr.mxu0 0.0
        %359 = vmatpush1.msra.mxu0 0.0
        %360 = vmatprep.subr.mxu0 0.0
        %361 = vmatpush1.msra.mxu0 0.0
        %362 = vmatprep.subr.mxu0 0.0
        %363 = vmatpush1.msra.mxu0 0.0
        %364 = vmatprep.subr.mxu0 0.0
        %365 = vmatpush1.msra.mxu0 0.0
        %366 = vmatprep.subr.mxu0 0.0
        %367 = vmatpush1.msra.mxu0 0.0
        %368 = vmatprep.subr.mxu0 0.0
        %369 = vmatpush1.msra.mxu0 0.0
        %370 = vmatprep.subr.mxu0 0.0
        %371 = vmatpush1.msra.mxu0 0.0
        %372 = vmatprep.subr.mxu0 0.0
        %373 = vmatpush1.msra.mxu0 0.0
        %374 = vmatprep.subr.mxu0 0.0
        %375 = vmatpush1.msra.mxu0 0.0
        %376 = vmatprep.subr.mxu0 0.0
        %377 = vmatpush1.msra.mxu0 0.0
        %378 = vmatprep.subr.mxu0 0.0
        %379 = vmatpush1.msra.mxu0 0.0
        %380 = vmatprep.subr.mxu0 0.0
        %381 = vmatpush1.msra.mxu0 0.0
        %382 = vmatprep.subr.mxu0 0.0
        %383 = vmatpush1.msra.mxu0 0.0
        %384 = vmatprep.subr.mxu0 0.0
        %385 = vmatpush1.msra.mxu0 0.0
        %386 = vmatprep.subr.mxu0 0.0
        %387 = vmatpush1.msra.mxu0 0.0
        %388 = vmatprep.subr.mxu0 0.0
        %389 = vmatpush1.msra.mxu0 0.0
        %390 = vmatprep.subr.mxu0 0.0
        %391 = vmatpush1.msra.mxu0 0.0
        %392 = vmatprep.subr.mxu0 0.0
        %393 = vmatpush1.msra.mxu0 0.0
        %394 = vmatprep.subr.mxu0 0.0
        %395 = vmatpush1.msra.mxu0 0.0
        %396 = vmatprep.subr.mxu0 0.0
        %397 = vmatpush1.msra.mxu0 0.0
        %398 = vmatprep.subr.mxu0 0.0
        %399 = vmatpush1.msra.mxu0 0.0
        %400 = vmatprep.subr.mxu0 0.0
        %401 = vmatpush1.msra.mxu0 0.0
        %402 = vmatprep.subr.mxu0 0.0
        %403 = vmatpush1.msra.mxu0 0.0
        %404 = vmatprep.subr.mxu0 0.0
        %405 = vmatpush1.msra.mxu0 0.0
        %406 = vmatprep.subr.mxu0 0.0
        %407 = vmatpush1.msra.mxu0 0.0
        %408 = vmatprep.subr.mxu0 0.0
        %409 = vmatpush1.msra.mxu0 0.0
        %410 = vmatprep.subr.mxu0 0.0
        %411 = vmatpush1.msra.mxu0 0.0
        %412 = vmatprep.subr.mxu0 0.0
        %413 = vmatpush1.msra.mxu0 0.0
        %414 = vmatprep.subr.mxu0 0.0
        %415 = vmatpush1.msra.mxu0 0.0
        %416 = vmatprep.subr.mxu0 0.0
        %417 = vmatpush1.msra.mxu0 0.0
        %418 = vmatprep.subr.mxu0 0.0
        %419 = vmatpush1.msra.mxu0 0.0
        %420 = vmatprep.mubr.f32.mxu0 0.0
        %421 = vmatmul.mubr.f32.gmra.mrb[0].mxu0 %v352
        %v422 = vpop.f32.mrb[0].mxu0
        %v423 = vadd.f32 0.0, %v422
        %v424 = vpop.f32.mrb[0].mxu0
        %425 = vdwg.mxu0
        %v426 = vadd.f32 %v337, %v423
        %427 = vst [vmem:[%s160] sm:$0xff] %v426
        %v428 = vld [vmem:[%s169] sm:$0xff]
        %s429 = scalar_lea.vmem %s1, 24
        %v430 = vld [vmem:[%s429] sm:$0xff]
        %s431 = scalar_lea.vmem %s1, 32
        %v432 = vld [vmem:[%s431] sm:$0xff]
        %v434 = vcombine.high %v428, %v428
        %435 = vrot.lane.b32.xlu0 %v428, 124
        %v436 = vpop.permute.xlu0 %435
        %437 = vrot.lane.b32.xlu0 %v434, 124
        %v438 = vpop.permute.xlu0 %437
        %v439 = vsel %vm180, %v436, %v438
        %v441 = vsel %vm182, %v432, 0
        %v443 = vsel %vm186, %v439, 0
        %445 = vmatprep.subr.mxu0 0.0
        %446 = vmatpush1.msra.mxu0 %v443
        %447 = vmatprep.subr.mxu0 0.0
        %448 = vmatpush1.msra.mxu0 0.0
        %449 = vmatprep.subr.mxu0 0.0
        %450 = vmatpush1.msra.mxu0 0.0
        %451 = vmatprep.subr.mxu0 0.0
        %452 = vmatpush1.msra.mxu0 0.0
        %453 = vmatprep.subr.mxu0 0.0
        %454 = vmatpush1.msra.mxu0 0.0
        %455 = vmatprep.subr.mxu0 0.0
        %456 = vmatpush1.msra.mxu0 0.0
        %457 = vmatprep.subr.mxu0 0.0
        %458 = vmatpush1.msra.mxu0 0.0
        %459 = vmatprep.subr.mxu0 0.0
        %460 = vmatpush1.msra.mxu0 0.0
        %461 = vmatprep.subr.mxu0 0.0
        %462 = vmatpush1.msra.mxu0 0.0
        %463 = vmatprep.subr.mxu0 0.0
        %464 = vmatpush1.msra.mxu0 0.0
        %465 = vmatprep.subr.mxu0 0.0
        %466 = vmatpush1.msra.mxu0 0.0
        %467 = vmatprep.subr.mxu0 0.0
        %468 = vmatpush1.msra.mxu0 0.0
        %469 = vmatprep.subr.mxu0 0.0
        %470 = vmatpush1.msra.mxu0 0.0
        %471 = vmatprep.subr.mxu0 0.0
        %472 = vmatpush1.msra.mxu0 0.0
        %473 = vmatprep.subr.mxu0 0.0
        %474 = vmatpush1.msra.mxu0 0.0
        %475 = vmatprep.subr.mxu0 0.0
        %476 = vmatpush1.msra.mxu0 0.0
        %477 = vmatprep.subr.mxu0 0.0
        %478 = vmatpush1.msra.mxu0 0.0
        %479 = vmatprep.subr.mxu0 0.0
        %480 = vmatpush1.msra.mxu0 0.0
        %481 = vmatprep.subr.mxu0 0.0
        %482 = vmatpush1.msra.mxu0 0.0
        %483 = vmatprep.subr.mxu0 0.0
        %484 = vmatpush1.msra.mxu0 0.0
        %485 = vmatprep.subr.mxu0 0.0
        %486 = vmatpush1.msra.mxu0 0.0
        %487 = vmatprep.subr.mxu0 0.0
        %488 = vmatpush1.msra.mxu0 0.0
        %489 = vmatprep.subr.mxu0 0.0
        %490 = vmatpush1.msra.mxu0 0.0
        %491 = vmatprep.subr.mxu0 0.0
        %492 = vmatpush1.msra.mxu0 0.0
        %493 = vmatprep.subr.mxu0 0.0
        %494 = vmatpush1.msra.mxu0 0.0
        %495 = vmatprep.subr.mxu0 0.0
        %496 = vmatpush1.msra.mxu0 0.0
        %497 = vmatprep.subr.mxu0 0.0
        %498 = vmatpush1.msra.mxu0 0.0
        %499 = vmatprep.subr.mxu0 0.0
        %500 = vmatpush1.msra.mxu0 0.0
        %501 = vmatprep.subr.mxu0 0.0
        %502 = vmatpush1.msra.mxu0 0.0
        %503 = vmatprep.subr.mxu0 0.0
        %504 = vmatpush1.msra.mxu0 0.0
        %505 = vmatprep.subr.mxu0 0.0
        %506 = vmatpush1.msra.mxu0 0.0
        %507 = vmatprep.subr.mxu0 0.0
        %508 = vmatpush1.msra.mxu0 0.0
        %509 = vmatprep.mubr.f32.mxu0 0.0
        %510 = vmatmul.mubr.f32.gmra.mrb[0].mxu0 %v441
        %v511 = vpop.f32.mrb[0].mxu0
        %v512 = vadd.f32 0.0, %v511
        %v513 = vpop.f32.mrb[0].mxu0
        %514 = vdwg.mxu0
        %515 = vrot.lane.b32.xlu0 %v428, 126
        %v516 = vpop.permute.xlu0 %515
        %517 = vrot.lane.b32.xlu0 %v434, 126
        %v518 = vpop.permute.xlu0 %517
        %vm519 = vcmask 1031168
        %v520 = vsel %vm519, %v516, %v518
        %v522 = vsel %vm182, %v430, 0
        %v524 = vsel %vm186, %v520, 0
        %526 = vmatprep.subr.mxu0 0.0
        %527 = vmatpush1.msra.mxu0 %v524
        %528 = vmatprep.subr.mxu0 0.0
        %529 = vmatpush1.msra.mxu0 0.0
        %530 = vmatprep.subr.mxu0 0.0
        %531 = vmatpush1.msra.mxu0 0.0
        %532 = vmatprep.subr.mxu0 0.0
        %533 = vmatpush1.msra.mxu0 0.0
        %534 = vmatprep.subr.mxu0 0.0
        %535 = vmatpush1.msra.mxu0 0.0
        %536 = vmatprep.subr.mxu0 0.0
        %537 = vmatpush1.msra.mxu0 0.0
        %538 = vmatprep.subr.mxu0 0.0
        %539 = vmatpush1.msra.mxu0 0.0
        %540 = vmatprep.subr.mxu0 0.0
        %541 = vmatpush1.msra.mxu0 0.0
        %542 = vmatprep.subr.mxu0 0.0
        %543 = vmatpush1.msra.mxu0 0.0
        %544 = vmatprep.subr.mxu0 0.0
        %545 = vmatpush1.msra.mxu0 0.0
        %546 = vmatprep.subr.mxu0 0.0
        %547 = vmatpush1.msra.mxu0 0.0
        %548 = vmatprep.subr.mxu0 0.0
        %549 = vmatpush1.msra.mxu0 0.0
        %550 = vmatprep.subr.mxu0 0.0
        %551 = vmatpush1.msra.mxu0 0.0
        %552 = vmatprep.subr.mxu0 0.0
        %553 = vmatpush1.msra.mxu0 0.0
        %554 = vmatprep.subr.mxu0 0.0
        %555 = vmatpush1.msra.mxu0 0.0
        %556 = vmatprep.subr.mxu0 0.0
        %557 = vmatpush1.msra.mxu0 0.0
        %558 = vmatprep.subr.mxu0 0.0
        %559 = vmatpush1.msra.mxu0 0.0
        %560 = vmatprep.subr.mxu0 0.0
        %561 = vmatpush1.msra.mxu0 0.0
        %562 = vmatprep.subr.mxu0 0.0
        %563 = vmatpush1.msra.mxu0 0.0
        %564 = vmatprep.subr.mxu0 0.0
        %565 = vmatpush1.msra.mxu0 0.0
        %566 = vmatprep.subr.mxu0 0.0
        %567 = vmatpush1.msra.mxu0 0.0
        %568 = vmatprep.subr.mxu0 0.0
        %569 = vmatpush1.msra.mxu0 0.0
        %570 = vmatprep.subr.mxu0 0.0
        %571 = vmatpush1.msra.mxu0 0.0
        %572 = vmatprep.subr.mxu0 0.0
        %573 = vmatpush1.msra.mxu0 0.0
        %574 = vmatprep.subr.mxu0 0.0
        %575 = vmatpush1.msra.mxu0 0.0
        %576 = vmatprep.subr.mxu0 0.0
        %577 = vmatpush1.msra.mxu0 0.0
        %578 = vmatprep.subr.mxu0 0.0
        %579 = vmatpush1.msra.mxu0 0.0
        %580 = vmatprep.subr.mxu0 0.0
        %581 = vmatpush1.msra.mxu0 0.0
        %582 = vmatprep.subr.mxu0 0.0
        %583 = vmatpush1.msra.mxu0 0.0
        %584 = vmatprep.subr.mxu0 0.0
        %585 = vmatpush1.msra.mxu0 0.0
        %586 = vmatprep.subr.mxu0 0.0
        %587 = vmatpush1.msra.mxu0 0.0
        %588 = vmatprep.subr.mxu0 0.0
        %589 = vmatpush1.msra.mxu0 0.0
        %590 = vmatprep.mubr.f32.mxu0 0.0
        %591 = vmatmul.mubr.f32.gmra.mrb[0].mxu0 %v522
        %v592 = vpop.f32.mrb[0].mxu0
        %v593 = vadd.f32 %v512, %v592
        %v594 = vpop.f32.mrb[0].mxu0
        %595 = vdwg.mxu0
        %v596 = vld [vmem:[%s169] sm:$0xff]
        %s597 = scalar_lea.vmem %s1, 40
        %v598 = vld [vmem:[%s597] sm:$0xff]
        %v600 = vcombine.high %v596, %v596
        %601 = vrot.lane.b32.xlu0 %v596, 122
        %v602 = vpop.permute.xlu0 %601
        %603 = vrot.lane.b32.xlu0 %v600, 122
        %v604 = vpop.permute.xlu0 %603
        %vm605 = vcmask 998400
        %v606 = vsel %vm605, %v602, %v604
        %v608 = vsel %vm182, %v598, 0
        %v610 = vsel %vm186, %v606, 0
        %612 = vmatprep.subr.mxu0 0.0
        %613 = vmatpush1.msra.mxu0 %v610
        %614 = vmatprep.subr.mxu0 0.0
        %615 = vmatpush1.msra.mxu0 0.0
        %616 = vmatprep.subr.mxu0 0.0
        %617 = vmatpush1.msra.mxu0 0.0
        %618 = vmatprep.subr.mxu0 0.0
        %619 = vmatpush1.msra.mxu0 0.0
        %620 = vmatprep.subr.mxu0 0.0
        %621 = vmatpush1.msra.mxu0 0.0
        %622 = vmatprep.subr.mxu0 0.0
        %623 = vmatpush1.msra.mxu0 0.0
        %624 = vmatprep.subr.mxu0 0.0
        %625 = vmatpush1.msra.mxu0 0.0
        %626 = vmatprep.subr.mxu0 0.0
        %627 = vmatpush1.msra.mxu0 0.0
        %628 = vmatprep.subr.mxu0 0.0
        %629 = vmatpush1.msra.mxu0 0.0
        %630 = vmatprep.subr.mxu0 0.0
        %631 = vmatpush1.msra.mxu0 0.0
        %632 = vmatprep.subr.mxu0 0.0
        %633 = vmatpush1.msra.mxu0 0.0
        %634 = vmatprep.subr.mxu0 0.0
        %635 = vmatpush1.msra.mxu0 0.0
        %636 = vmatprep.subr.mxu0 0.0
        %637 = vmatpush1.msra.mxu0 0.0
        %638 = vmatprep.subr.mxu0 0.0
        %639 = vmatpush1.msra.mxu0 0.0
        %640 = vmatprep.subr.mxu0 0.0
        %641 = vmatpush1.msra.mxu0 0.0
        %642 = vmatprep.subr.mxu0 0.0
        %643 = vmatpush1.msra.mxu0 0.0
        %644 = vmatprep.subr.mxu0 0.0
        %645 = vmatpush1.msra.mxu0 0.0
        %646 = vmatprep.subr.mxu0 0.0
        %647 = vmatpush1.msra.mxu0 0.0
        %648 = vmatprep.subr.mxu0 0.0
        %649 = vmatpush1.msra.mxu0 0.0
        %650 = vmatprep.subr.mxu0 0.0
        %651 = vmatpush1.msra.mxu0 0.0
        %652 = vmatprep.subr.mxu0 0.0
        %653 = vmatpush1.msra.mxu0 0.0
        %654 = vmatprep.subr.mxu0 0.0
        %655 = vmatpush1.msra.mxu0 0.0
        %656 = vmatprep.subr.mxu0 0.0
        %657 = vmatpush1.msra.mxu0 0.0
        %658 = vmatprep.subr.mxu0 0.0
        %659 = vmatpush1.msra.mxu0 0.0
        %660 = vmatprep.subr.mxu0 0.0
        %661 = vmatpush1.msra.mxu0 0.0
        %662 = vmatprep.subr.mxu0 0.0
        %663 = vmatpush1.msra.mxu0 0.0
        %664 = vmatprep.subr.mxu0 0.0
        %665 = vmatpush1.msra.mxu0 0.0
        %666 = vmatprep.subr.mxu0 0.0
        %667 = vmatpush1.msra.mxu0 0.0
        %668 = vmatprep.subr.mxu0 0.0
        %669 = vmatpush1.msra.mxu0 0.0
        %670 = vmatprep.subr.mxu0 0.0
        %671 = vmatpush1.msra.mxu0 0.0
        %672 = vmatprep.subr.mxu0 0.0
        %673 = vmatpush1.msra.mxu0 0.0
        %674 = vmatprep.subr.mxu0 0.0
        %675 = vmatpush1.msra.mxu0 0.0
        %676 = vmatprep.mubr.f32.mxu0 0.0
        %677 = vmatmul.mubr.f32.gmra.mrb[0].mxu0 %v608
        %v678 = vpop.f32.mrb[0].mxu0
        %v679 = vadd.f32 0.0, %v678
        %v680 = vpop.f32.mrb[0].mxu0
        %681 = vdwg.mxu0
        %v682 = vadd.f32 %v593, %v679
        %s683 = scalar_lea.vmem %s160, 8 [#allocation2]
        %684 = vst [vmem:[%s683] sm:$0xff] %v682
        %v685 = vld [vmem:[%s169] sm:$0xf]
        %s686 = scalar_lea.vmem %s1, 48
        %v687 = vld [vmem:[%s686] sm:$0xff]
        %v688 = vld [vmem:[%s169] sm:$0xff]
        %s689 = scalar_lea.vmem %s1, 56
        %v690 = vld [vmem:[%s689] sm:$0xff]
        %v692 = vcombine.high %v688, %v688
        %693 = vrot.lane.b32.xlu0 %v688, 124
        %v694 = vpop.permute.xlu0 %693
        %695 = vrot.lane.b32.xlu0 %v692, 124
        %v696 = vpop.permute.xlu0 %695
        %v697 = vsel %vm180, %v694, %v696
        %v699 = vsel %vm182, %v690, 0
        %v701 = vsel %vm186, %v697, 0
        %703 = vmatprep.subr.mxu0 0.0
        %704 = vmatpush1.msra.mxu0 %v701
        %705 = vmatprep.subr.mxu0 0.0
        %706 = vmatpush1.msra.mxu0 0.0
        %707 = vmatprep.subr.mxu0 0.0
        %708 = vmatpush1.msra.mxu0 0.0
        %709 = vmatprep.subr.mxu0 0.0
        %710 = vmatpush1.msra.mxu0 0.0
        %711 = vmatprep.subr.mxu0 0.0
        %712 = vmatpush1.msra.mxu0 0.0
        %713 = vmatprep.subr.mxu0 0.0
        %714 = vmatpush1.msra.mxu0 0.0
        %715 = vmatprep.subr.mxu0 0.0
        %716 = vmatpush1.msra.mxu0 0.0
        %717 = vmatprep.subr.mxu0 0.0
        %718 = vmatpush1.msra.mxu0 0.0
        %719 = vmatprep.subr.mxu0 0.0
        %720 = vmatpush1.msra.mxu0 0.0
        %721 = vmatprep.subr.mxu0 0.0
        %722 = vmatpush1.msra.mxu0 0.0
        %723 = vmatprep.subr.mxu0 0.0
        %724 = vmatpush1.msra.mxu0 0.0
        %725 = vmatprep.subr.mxu0 0.0
        %726 = vmatpush1.msra.mxu0 0.0
        %727 = vmatprep.subr.mxu0 0.0
        %728 = vmatpush1.msra.mxu0 0.0
        %729 = vmatprep.subr.mxu0 0.0
        %730 = vmatpush1.msra.mxu0 0.0
        %731 = vmatprep.subr.mxu0 0.0
        %732 = vmatpush1.msra.mxu0 0.0
        %733 = vmatprep.subr.mxu0 0.0
        %734 = vmatpush1.msra.mxu0 0.0
        %735 = vmatprep.subr.mxu0 0.0
        %736 = vmatpush1.msra.mxu0 0.0
        %737 = vmatprep.subr.mxu0 0.0
        %738 = vmatpush1.msra.mxu0 0.0
        %739 = vmatprep.subr.mxu0 0.0
        %740 = vmatpush1.msra.mxu0 0.0
        %741 = vmatprep.subr.mxu0 0.0
        %742 = vmatpush1.msra.mxu0 0.0
        %743 = vmatprep.subr.mxu0 0.0
        %744 = vmatpush1.msra.mxu0 0.0
        %745 = vmatprep.subr.mxu0 0.0
        %746 = vmatpush1.msra.mxu0 0.0
        %747 = vmatprep.subr.mxu0 0.0
        %748 = vmatpush1.msra.mxu0 0.0
        %749 = vmatprep.subr.mxu0 0.0
        %750 = vmatpush1.msra.mxu0 0.0
        %751 = vmatprep.subr.mxu0 0.0
        %752 = vmatpush1.msra.mxu0 0.0
        %753 = vmatprep.subr.mxu0 0.0
        %754 = vmatpush1.msra.mxu0 0.0
        %755 = vmatprep.subr.mxu0 0.0
        %756 = vmatpush1.msra.mxu0 0.0
        %757 = vmatprep.subr.mxu0 0.0
        %758 = vmatpush1.msra.mxu0 0.0
        %759 = vmatprep.subr.mxu0 0.0
        %760 = vmatpush1.msra.mxu0 0.0
        %761 = vmatprep.subr.mxu0 0.0
        %762 = vmatpush1.msra.mxu0 0.0
        %763 = vmatprep.subr.mxu0 0.0
        %764 = vmatpush1.msra.mxu0 0.0
        %765 = vmatprep.subr.mxu0 0.0
        %766 = vmatpush1.msra.mxu0 0.0
        %767 = vmatprep.mubr.f32.mxu0 0.0
        %768 = vmatmul.mubr.f32.gmra.mrb[0].mxu0 %v699
        %v769 = vpop.f32.mrb[0].mxu0
        %v770 = vadd.f32 0.0, %v769
        %v771 = vpop.f32.mrb[0].mxu0
        %772 = vdwg.mxu0
        %v774 = vsel %vm182, %v687, 0
        %v777 = vsel %vm186, %v685, 0
        %779 = vmatprep.subr.mxu0 0.0
        %780 = vmatpush1.msra.mxu0 %v777
        %781 = vmatprep.subr.mxu0 0.0
        %782 = vmatpush1.msra.mxu0 0.0
        %783 = vmatprep.subr.mxu0 0.0
        %784 = vmatpush1.msra.mxu0 0.0
        %785 = vmatprep.subr.mxu0 0.0
        %786 = vmatpush1.msra.mxu0 0.0
        %787 = vmatprep.subr.mxu0 0.0
        %788 = vmatpush1.msra.mxu0 0.0
        %789 = vmatprep.subr.mxu0 0.0
        %790 = vmatpush1.msra.mxu0 0.0
        %791 = vmatprep.subr.mxu0 0.0
        %792 = vmatpush1.msra.mxu0 0.0
        %793 = vmatprep.subr.mxu0 0.0
        %794 = vmatpush1.msra.mxu0 0.0
        %795 = vmatprep.subr.mxu0 0.0
        %796 = vmatpush1.msra.mxu0 0.0
        %797 = vmatprep.subr.mxu0 0.0
        %798 = vmatpush1.msra.mxu0 0.0
        %799 = vmatprep.subr.mxu0 0.0
        %800 = vmatpush1.msra.mxu0 0.0
        %801 = vmatprep.subr.mxu0 0.0
        %802 = vmatpush1.msra.mxu0 0.0
        %803 = vmatprep.subr.mxu0 0.0
        %804 = vmatpush1.msra.mxu0 0.0
        %805 = vmatprep.subr.mxu0 0.0
        %806 = vmatpush1.msra.mxu0 0.0
        %807 = vmatprep.subr.mxu0 0.0
        %808 = vmatpush1.msra.mxu0 0.0
        %809 = vmatprep.subr.mxu0 0.0
        %810 = vmatpush1.msra.mxu0 0.0
        %811 = vmatprep.subr.mxu0 0.0
        %812 = vmatpush1.msra.mxu0 0.0
        %813 = vmatprep.subr.mxu0 0.0
        %814 = vmatpush1.msra.mxu0 0.0
        %815 = vmatprep.subr.mxu0 0.0
        %816 = vmatpush1.msra.mxu0 0.0
        %817 = vmatprep.subr.mxu0 0.0
        %818 = vmatpush1.msra.mxu0 0.0
        %819 = vmatprep.subr.mxu0 0.0
        %820 = vmatpush1.msra.mxu0 0.0
        %821 = vmatprep.subr.mxu0 0.0
        %822 = vmatpush1.msra.mxu0 0.0
        %823 = vmatprep.subr.mxu0 0.0
        %824 = vmatpush1.msra.mxu0 0.0
        %825 = vmatprep.subr.mxu0 0.0
        %826 = vmatpush1.msra.mxu0 0.0
        %827 = vmatprep.subr.mxu0 0.0
        %828 = vmatpush1.msra.mxu0 0.0
        %829 = vmatprep.subr.mxu0 0.0
        %830 = vmatpush1.msra.mxu0 0.0
        %831 = vmatprep.subr.mxu0 0.0
        %832 = vmatpush1.msra.mxu0 0.0
        %833 = vmatprep.subr.mxu0 0.0
        %834 = vmatpush1.msra.mxu0 0.0
        %835 = vmatprep.subr.mxu0 0.0
        %836 = vmatpush1.msra.mxu0 0.0
        %837 = vmatprep.subr.mxu0 0.0
        %838 = vmatpush1.msra.mxu0 0.0
        %839 = vmatprep.subr.mxu0 0.0
        %840 = vmatpush1.msra.mxu0 0.0
        %841 = vmatprep.subr.mxu0 0.0
        %842 = vmatpush1.msra.mxu0 0.0
        %843 = vmatprep.mubr.f32.mxu0 0.0
        %844 = vmatmul.mubr.f32.gmra.mrb[0].mxu0 %v774
        %v845 = vpop.f32.mrb[0].mxu0
        %v846 = vadd.f32 %v770, %v845
        %v847 = vpop.f32.mrb[0].mxu0
        %848 = vdwg.mxu0
        %v849 = vld [vmem:[%s169] sm:$0xff]
        %s850 = scalar_lea.vmem %s1, 64
        %v851 = vld [vmem:[%s850] sm:$0xff]
        %v853 = vcombine.high %v849, %v849
        %854 = vrot.lane.b32.xlu0 %v849, 120
        %v855 = vpop.permute.xlu0 %854
        %856 = vrot.lane.b32.xlu0 %v853, 120
        %v857 = vpop.permute.xlu0 %856
        %vm858 = vcmask 982016
        %v859 = vsel %vm858, %v855, %v857
        %v861 = vsel %vm182, %v851, 0
        %v863 = vsel %vm186, %v859, 0
        %865 = vmatprep.subr.mxu0 0.0
        %866 = vmatpush1.msra.mxu0 %v863
        %867 = vmatprep.subr.mxu0 0.0
        %868 = vmatpush1.msra.mxu0 0.0
        %869 = vmatprep.subr.mxu0 0.0
        %870 = vmatpush1.msra.mxu0 0.0
        %871 = vmatprep.subr.mxu0 0.0
        %872 = vmatpush1.msra.mxu0 0.0
        %873 = vmatprep.subr.mxu0 0.0
        %874 = vmatpush1.msra.mxu0 0.0
        %875 = vmatprep.subr.mxu0 0.0
        %876 = vmatpush1.msra.mxu0 0.0
        %877 = vmatprep.subr.mxu0 0.0
        %878 = vmatpush1.msra.mxu0 0.0
        %879 = vmatprep.subr.mxu0 0.0
        %880 = vmatpush1.msra.mxu0 0.0
        %881 = vmatprep.subr.mxu0 0.0
        %882 = vmatpush1.msra.mxu0 0.0
        %883 = vmatprep.subr.mxu0 0.0
        %884 = vmatpush1.msra.mxu0 0.0
        %885 = vmatprep.subr.mxu0 0.0
        %886 = vmatpush1.msra.mxu0 0.0
        %887 = vmatprep.subr.mxu0 0.0
        %888 = vmatpush1.msra.mxu0 0.0
        %889 = vmatprep.subr.mxu0 0.0
        %890 = vmatpush1.msra.mxu0 0.0
        %891 = vmatprep.subr.mxu0 0.0
        %892 = vmatpush1.msra.mxu0 0.0
        %893 = vmatprep.subr.mxu0 0.0
        %894 = vmatpush1.msra.mxu0 0.0
        %895 = vmatprep.subr.mxu0 0.0
        %896 = vmatpush1.msra.mxu0 0.0
        %897 = vmatprep.subr.mxu0 0.0
        %898 = vmatpush1.msra.mxu0 0.0
        %899 = vmatprep.subr.mxu0 0.0
        %900 = vmatpush1.msra.mxu0 0.0
        %901 = vmatprep.subr.mxu0 0.0
        %902 = vmatpush1.msra.mxu0 0.0
        %903 = vmatprep.subr.mxu0 0.0
        %904 = vmatpush1.msra.mxu0 0.0
        %905 = vmatprep.subr.mxu0 0.0
        %906 = vmatpush1.msra.mxu0 0.0
        %907 = vmatprep.subr.mxu0 0.0
        %908 = vmatpush1.msra.mxu0 0.0
        %909 = vmatprep.subr.mxu0 0.0
        %910 = vmatpush1.msra.mxu0 0.0
        %911 = vmatprep.subr.mxu0 0.0
        %912 = vmatpush1.msra.mxu0 0.0
        %913 = vmatprep.subr.mxu0 0.0
        %914 = vmatpush1.msra.mxu0 0.0
        %915 = vmatprep.subr.mxu0 0.0
        %916 = vmatpush1.msra.mxu0 0.0
        %917 = vmatprep.subr.mxu0 0.0
        %918 = vmatpush1.msra.mxu0 0.0
        %919 = vmatprep.subr.mxu0 0.0
        %920 = vmatpush1.msra.mxu0 0.0
        %921 = vmatprep.subr.mxu0 0.0
        %922 = vmatpush1.msra.mxu0 0.0
        %923 = vmatprep.subr.mxu0 0.0
        %924 = vmatpush1.msra.mxu0 0.0
        %925 = vmatprep.subr.mxu0 0.0
        %926 = vmatpush1.msra.mxu0 0.0
        %927 = vmatprep.subr.mxu0 0.0
        %928 = vmatpush1.msra.mxu0 0.0
        %929 = vmatprep.mubr.f32.mxu0 0.0
        %930 = vmatmul.mubr.f32.gmra.mrb[0].mxu0 %v861
        %v931 = vpop.f32.mrb[0].mxu0
        %v932 = vadd.f32 0.0, %v931
        %v933 = vpop.f32.mrb[0].mxu0
        %934 = vdwg.mxu0
        %v935 = vadd.f32 %v846, %v932
        %s936 = scalar_lea.vmem %s160, 16 [#allocation2]
        %937 = vst [vmem:[%s936] sm:$0xff] %v935
        %s938 = sand.u32 %s87, 1
        %s939 = scalar_lea.sflag [#allocation3], %s938
        %s940 = sand.u32 %s87, 1
        %s941 = smul.addr %s940, 24
        %s942 = scalar_lea.vmem [#allocation2], %s941
        // Predicated region
        $region29: #{tpu_custom_call.1} parent=27 // pred_check
          %p943 = pneg %p97
        $region30: #{tpu_custom_call.1} parent=27 // pred_check_branch
          %945 = sbr.rel (%p943) target = $region32
        $region31: #{tpu_custom_call.1} parent=27 // pred_region
          %s947 = ssub.s32 384, 384
          %948 = vsyncadd %s939, %s947
          %s949 = smul.addr %s20, 3
          %s950 = sadd.s32 %s21, %s949
          %s951 = smul.addr %s950, 128
          %s952 = scalar_lea.hbm %s2, %s951
          %s953 = sshll.u32 %s942, 4
          %s954 = int_to_ptr.vmem [resolvable:$true] %s953
          %959 = dma.vmem_to_hbm [thread:$0]  %s954, 384, %s952, %s939, 128, 128, 8
        $region32: #{tpu_custom_call.1} parent=27 // pred_fallthru
          _
      $region28: #{tpu_custom_call.1} parent=5 // pred_fallthru
        _
      %p960 = scmp.le.s32.totalorder 2, %s11
      // Predicated region
      $region33: #{tpu_custom_call.1} parent=5 // pred_check
        %p961 = pneg %p960
      $region34: #{tpu_custom_call.1} parent=5 // pred_check_branch
        %963 = sbr.rel (%p961) target = $region36
      $region35: #{tpu_custom_call.1} parent=5 // pred_region
        %s964 = ssub.s32 %s11, 2
        // Predicated region
        $region37: #{tpu_custom_call.1} parent=35 // pred_check
          %p965 = pneg %p103
        $region38: #{tpu_custom_call.1} parent=35 // pred_check_branch
          %967 = sbr.rel (%p965) target = $region40
        $region39: #{tpu_custom_call.1} parent=35 // pred_region
          %s968 = sand.u32 %s88, 1
          %s969 = scalar_lea.sflag [#allocation3], %s968
          %s970 = sand.u32 %s88, 1
          %s971 = smul.addr %s970, 24
          %s972 = scalar_lea.vmem [#allocation2], %s971
          %973 = dma.done %s969, 384
        $region40: #{tpu_custom_call.1} parent=35 // pred_fallthru
          _
      $region36: #{tpu_custom_call.1} parent=5 // pred_fallthru
        _
    $region6: #{tpu_custom_call.1} parent=1 // loop_footer
      %s15 = sadd.s32 1, %s11
    $region7: #{tpu_custom_call.1} parent=1 // loop_footer_branch
      %10 = sbr.rel target = $region3
    $region8: #{tpu_custom_call.1} parent=1 // loop_exit
      _
    %974 = vsyncpa [#allocation3], 1
    %s975 = scalar_lea.sflag [#allocation3], 1
    %976 = vsyncpa %s975, 1

</llo_original>
